<compile_context>
chip_gen: v7x
topology: tpu7x:2x2x1
jax: 0.10.0
libtpu: 0.0.40
codegen_flags: <defaults>
</compile_context>

<pallas_src>
import functools

import jax
import jax.numpy as jnp
from jax.experimental import pallas as pl
from jax.experimental.pallas import tpu as pltpu

LANE = 128


def _round_up(n, m):
    return ((n + m - 1) // m) * m


def _softplus(z):
    # Matches F.softplus semantics (numerically stable log(1 + exp(z))).
    return jnp.maximum(z, 0.0) + jnp.log1p(jnp.exp(-jnp.abs(z)))


def _swish(z):
    return z * jax.nn.sigmoid(z)


def _pad2(a, rows, cols):
    r, c = a.shape
    return jnp.pad(a, ((0, rows - r), (0, cols - c)))


def _pets_kernel(nidx_ref, x_ref, noise_ref,
                 w1_ref, b1_ref, w2_ref, b2_ref, w3_ref, b3_ref,
                 maxlv_ref, minlv_ref, out_ref, *, obs_dim):
    """One batch tile: MLP -> fused 3-head matmul -> logvar bounding -> sample."""
    del nidx_ref  # consumed by the index_maps (ensemble-member selection)

    x = x_ref[...]
    h1 = _swish(jnp.dot(x, w1_ref[...], preferred_element_type=jnp.float32) + b1_ref[...])
    h2 = _swish(jnp.dot(h1, w2_ref[...], preferred_element_type=jnp.float32) + b2_ref[...])

    # Single fused head matmul: [TB, H2] x [H2, 3*OUT_P]; slices are 128-aligned.
    out3 = jnp.dot(h2, w3_ref[...], preferred_element_type=jnp.float32) + b3_ref[...]
    out_p = out3.shape[-1] // 3
    mean = out3[:, :out_p]
    logvar = out3[:, out_p:2 * out_p]
    rew = out3[:, 2 * out_p:]  # reward already sits at lane `obs_dim` (weight packing)

    max_lv = maxlv_ref[...]
    min_lv = minlv_ref[...]
    logvar = max_lv - _softplus(max_lv - logvar)
    logvar = min_lv + _softplus(logvar - min_lv)
    std = jnp.exp(0.5 * logvar)  # == sqrt(exp(logvar)), one transcendental instead of two

    next_obs = mean + noise_ref[...] * std

    # Lane-dense output slab: lanes [0, obs_dim) = next_obs, lane obs_dim = reward.
    lane = jax.lax.broadcasted_iota(jnp.int32, next_obs.shape, 1)
    out_ref[...] = jnp.where(lane < obs_dim, next_obs, rew)


def pack_params(params, obs_dim, action_dim):
    """Pad/stack PyTorch-shaped params into lane-aligned, ensemble-stacked tensors."""
    nets = params["nets"]
    h1 = nets[0]["w1"].shape[1]
    h2 = nets[0]["w2"].shape[1]
    d_in = obs_dim + action_dim
    D_IN = _round_up(d_in, LANE)
    H1 = _round_up(h1, LANE)
    H2 = _round_up(h2, LANE)
    OUT = _round_up(obs_dim + 1, LANE)  # next_obs lanes + one reward lane

    w1s, b1s, w2s, b2s, w3s, b3s = [], [], [], [], [], []
    for net in nets:
        w1s.append(_pad2(net["w1"].astype(jnp.float32), D_IN, H1))
        b1s.append(_pad2(net["b1"].astype(jnp.float32), 1, H1))
        w2s.append(_pad2(net["w2"].astype(jnp.float32), H1, H2))
        b2s.append(_pad2(net["b2"].astype(jnp.float32), 1, H2))
        w3 = net["w3"].astype(jnp.float32)
        b3 = net["b3"].astype(jnp.float32)
        # Fused head: [mean(0:OUT) | logvar(OUT:2*OUT) | reward(2*OUT:3*OUT)];
        # reward column placed at offset 2*OUT + obs_dim so it lands at output lane obs_dim.
        w3f = jnp.zeros((H2, 3 * OUT), jnp.float32)
        w3f = w3f.at[:h2, 0:obs_dim].set(w3[:, :obs_dim])
        w3f = w3f.at[:h2, OUT:OUT + obs_dim].set(w3[:, obs_dim:2 * obs_dim])
        w3f = w3f.at[:h2, 2 * OUT + obs_dim:2 * OUT + obs_dim + 1].set(w3[:, 2 * obs_dim:])
        b3f = jnp.zeros((1, 3 * OUT), jnp.float32)
        b3f = b3f.at[:, 0:obs_dim].set(b3[:, :obs_dim])
        b3f = b3f.at[:, OUT:OUT + obs_dim].set(b3[:, obs_dim:2 * obs_dim])
        b3f = b3f.at[:, 2 * OUT + obs_dim:2 * OUT + obs_dim + 1].set(b3[:, 2 * obs_dim:])
        w3s.append(w3f)
        b3s.append(b3f)

    return dict(
        w1=jnp.stack(w1s), b1=jnp.stack(b1s),
        w2=jnp.stack(w2s), b2=jnp.stack(b2s),
        w3=jnp.stack(w3s), b3=jnp.stack(b3s),
        max_logvar=_pad2(params["max_logvar"].astype(jnp.float32), 1, OUT),
        min_logvar=_pad2(params["min_logvar"].astype(jnp.float32), 1, OUT),
    )


def pets_model_forward(obs, action, packed, noise, network_idx, *, obs_dim, tile_b=512):
    """Pallas-backed equivalent of Model.forward(obs, action, network_idx)."""
    batch = obs.shape[0]
    d_in = obs.shape[1] + action.shape[1]

    D_IN = packed["w1"].shape[1]
    H1 = packed["w1"].shape[2]
    H2 = packed["w2"].shape[2]
    OUT = packed["w3"].shape[2] // 3

    # Batch tiling: multiple of 8 sublanes; modest tile keeps double-buffered
    # activations far below the scoped-VMEM defaults on v5e/v6e/v7x.
    TILE_B = min(tile_b, _round_up(batch, 8))
    B_pad = _round_up(batch, TILE_B)
    n_tiles = B_pad // TILE_B

    x = jnp.concatenate([obs, action], axis=1).astype(jnp.float32)  # FlattenMlp concat
    x_p = jnp.zeros((B_pad, D_IN), jnp.float32).at[:batch, :d_in].set(x)
    noise_p = jnp.zeros((B_pad, OUT), jnp.float32).at[:batch, :obs_dim].set(
        noise.astype(jnp.float32))

    net_idx = jnp.asarray(network_idx, dtype=jnp.int32).reshape(1)

    grid_spec = pltpu.PrefetchScalarGridSpec(
        num_scalar_prefetch=1,
        grid=(n_tiles,),
        in_specs=[
            pl.BlockSpec((TILE_B, D_IN), lambda i, nidx: (i, 0)),                # x
            pl.BlockSpec((TILE_B, OUT), lambda i, nidx: (i, 0)),                 # noise
            pl.BlockSpec((None, D_IN, H1), lambda i, nidx: (nidx[0], 0, 0)),     # w1
            pl.BlockSpec((None, 1, H1), lambda i, nidx: (nidx[0], 0, 0)),        # b1
            pl.BlockSpec((None, H1, H2), lambda i, nidx: (nidx[0], 0, 0)),       # w2
            pl.BlockSpec((None, 1, H2), lambda i, nidx: (nidx[0], 0, 0)),        # b2
            pl.BlockSpec((None, H2, 3 * OUT), lambda i, nidx: (nidx[0], 0, 0)),  # w3 fused
            pl.BlockSpec((None, 1, 3 * OUT), lambda i, nidx: (nidx[0], 0, 0)),   # b3 fused
            pl.BlockSpec((1, OUT), lambda i, nidx: (0, 0)),                      # max_logvar
            pl.BlockSpec((1, OUT), lambda i, nidx: (0, 0)),                      # min_logvar
        ],
        out_specs=pl.BlockSpec((TILE_B, OUT), lambda i, nidx: (i, 0)),
    )

    slab = pl.pallas_call(
        functools.partial(_pets_kernel, obs_dim=obs_dim),
        out_shape=jax.ShapeDtypeStruct((B_pad, OUT), jnp.float32),
        grid_spec=grid_spec,
        compiler_params=pltpu.CompilerParams(
            dimension_semantics=("parallel",)),
    )(net_idx, x_p, noise_p,
      packed["w1"], packed["b1"], packed["w2"], packed["b2"],
      packed["w3"], packed["b3"],
      packed["max_logvar"], packed["min_logvar"])

    next_obs = slab[:batch, :obs_dim]
    reward = slab[:batch, obs_dim:obs_dim + 1]
    return next_obs, reward


def init_params(key, obs_dim, action_dim, hidden_sizes, num_bootstrap):
    """Deterministic synthetic init matching the module's parameter shapes."""
    input_size = obs_dim + action_dim
    output_dim = 2 * obs_dim + 1  # predict_reward=True (rew_function is None)
    nets = []
    for _ in range(num_bootstrap):
        h1, h2 = hidden_sizes
        key, k1, k2, k3 = jax.random.split(key, 4)
        nets.append(dict(
            w1=jax.random.normal(k1, (input_size, h1), jnp.float32) * 0.1,
            b1=jnp.full((1, h1), 0.1, jnp.float32),
            w2=jax.random.normal(k2, (h1, h2), jnp.float32) * 0.1,
            b2=jnp.full((1, h2), 0.1, jnp.float32),
            w3=jax.random.normal(k3, (h2, output_dim), jnp.float32) * 0.01,
            b3=jnp.zeros((1, output_dim), jnp.float32),
        ))
    return dict(
        nets=nets,
        max_logvar=jnp.ones((1, obs_dim), jnp.float32) / 2.0,
        min_logvar=-jnp.ones((1, obs_dim), jnp.float32) * 10.0,
    )


def ref_forward(obs, action, params, noise, network_idx, obs_dim):
    """Pure-JAX reference mirroring the PyTorch Model.forward."""
    net = params["nets"][network_idx]
    x = jnp.concatenate([obs, action], axis=1)
    h1 = _swish(x @ net["w1"] + net["b1"])
    h2 = _swish(h1 @ net["w2"] + net["b2"])
    out = h2 @ net["w3"] + net["b3"]
    mean = out[:, :obs_dim]
    logvar = out[:, obs_dim:2 * obs_dim]
    reward = out[:, -1:]
    logvar = params["max_logvar"] - jax.nn.softplus(params["max_logvar"] - logvar)
    logvar = params["min_logvar"] + jax.nn.softplus(logvar - params["min_logvar"])
    next_obs = mean + noise * jnp.exp(0.5 * logvar)
    return next_obs, reward


if __name__ == "__main__":
    obs_dim, action_dim = 8, 4
    hidden_sizes = (32, 32)
    num_bootstrap = 2
    batch = 8

    key = jax.random.PRNGKey(0)
    kp, ko, ka, kn = jax.random.split(key, 4)

    params = init_params(kp, obs_dim, action_dim, hidden_sizes, num_bootstrap)
    obs = jax.random.normal(ko, (batch, obs_dim), jnp.float32)
    action = jax.random.uniform(ka, (batch, action_dim), jnp.float32, -1.0, 1.0)
    # torch.randn_like(mean) equivalent, drawn outside the kernel for determinism.
    noise = jax.random.normal(kn, (batch, obs_dim), jnp.float32)

    packed = pack_params(params, obs_dim, action_dim)
    # network_idx is a runtime scalar (mirrors Model.forward's network selection);
    # one compile serves every ensemble member via scalar prefetch.
    fwd = jax.jit(functools.partial(pets_model_forward, obs_dim=obs_dim))

    for idx in range(num_bootstrap):
        next_obs, reward = fwd(obs, action, packed, noise, jnp.int32(idx))
        jax.block_until_ready((next_obs, reward))
        assert next_obs.shape == (batch, obs_dim)
        assert reward.shape == (batch, 1)
        assert bool(jnp.all(jnp.isfinite(next_obs))) and bool(jnp.all(jnp.isfinite(reward)))
        ref_obs, ref_rew = ref_forward(obs, action, params, noise, idx, obs_dim)
        assert bool(jnp.allclose(next_obs, ref_obs, atol=1e-2, rtol=1e-2))
        assert bool(jnp.allclose(reward, ref_rew, atol=1e-2, rtol=1e-2))

    print("KERNEL_OK")
</pallas_src>

<mosaic_0001>
module attributes {stable_mosaic.version = 11 : i64} {
  func.func @_pets_kernel(%arg0: i32, %arg1: memref<1xi32, #tpu.memory_space<smem>>, %arg2: memref<8x128xf32, #tpu.memory_space<vmem>>, %arg3: memref<8x128xf32, #tpu.memory_space<vmem>>, %arg4: memref<1x128x128xf32, #tpu.memory_space<vmem>>, %arg5: memref<1x1x128xf32, #tpu.memory_space<vmem>>, %arg6: memref<1x128x128xf32, #tpu.memory_space<vmem>>, %arg7: memref<1x1x128xf32, #tpu.memory_space<vmem>>, %arg8: memref<1x128x384xf32, #tpu.memory_space<vmem>>, %arg9: memref<1x1x384xf32, #tpu.memory_space<vmem>>, %arg10: memref<1x128xf32, #tpu.memory_space<vmem>>, %arg11: memref<1x128xf32, #tpu.memory_space<vmem>>, %arg12: memref<8x128xf32, #tpu.memory_space<vmem>>) attributes {dimension_semantics = [#tpu.dimension_semantics<parallel>], iteration_bounds = array<i64: 1>, scalar_prefetch = 1 : i64, scratch_operands = 0 : i64, tpu.core_type = #tpu.core_type<tc>, window_params = [{transform_indices = @transform_0, window_bounds = array<i64: 8, 128>}, {transform_indices = @transform_1, window_bounds = array<i64: 8, 128>}, {transform_indices = @transform_2, window_bounds = array<i64: 1, 128, 128>}, {transform_indices = @transform_3, window_bounds = array<i64: 1, 1, 128>}, {transform_indices = @transform_4, window_bounds = array<i64: 1, 128, 128>}, {transform_indices = @transform_5, window_bounds = array<i64: 1, 1, 128>}, {transform_indices = @transform_6, window_bounds = array<i64: 1, 128, 384>}, {transform_indices = @transform_7, window_bounds = array<i64: 1, 1, 384>}, {pipeline_mode = #tpu.pipeline_mode<synchronous>, transform_indices = @transform_8, window_bounds = array<i64: 1, 128>}, {pipeline_mode = #tpu.pipeline_mode<synchronous>, transform_indices = @transform_9, window_bounds = array<i64: 1, 128>}, {transform_indices = @transform_10, window_bounds = array<i64: 8, 128>}]} {
    %c0 = arith.constant 0 : index
    %c0_0 = arith.constant 0 : index
    %0 = vector.load %arg2[%c0, %c0_0] : memref<8x128xf32, #tpu.memory_space<vmem>>, vector<8x128xf32>
    %c0_1 = arith.constant 0 : index
    %c0_2 = arith.constant 0 : index
    %c0_3 = arith.constant 0 : index
    %1 = vector.load %arg4[%c0_1, %c0_2, %c0_3] : memref<1x128x128xf32, #tpu.memory_space<vmem>>, vector<1x128x128xf32>
    %2 = vector.shape_cast %1 : vector<1x128x128xf32> to vector<128x128xf32>
    %cst = arith.constant dense<0.000000e+00> : vector<8x128xf32>
    %3 = tpu.matmul %0, %2, %cst {dimension_numbers = #tpu.dot_dimension_numbers<[1], [0], [0], [1], [0, 0, 1, 1], [], []>} : vector<8x128xf32>, vector<128x128xf32>, vector<8x128xf32> -> vector<8x128xf32>
    %c0_4 = arith.constant 0 : index
    %c0_5 = arith.constant 0 : index
    %c0_6 = arith.constant 0 : index
    %4 = vector.load %arg5[%c0_4, %c0_5, %c0_6] : memref<1x1x128xf32, #tpu.memory_space<vmem>>, vector<1x1x128xf32>
    %5 = vector.shape_cast %4 : vector<1x1x128xf32> to vector<1x128xf32>
    %6 = vector.broadcast %5 : vector<1x128xf32> to vector<8x128xf32>
    %7 = arith.addf %3, %6 : vector<8x128xf32>
    %8 = arith.negf %7 : vector<8x128xf32>
    %9 = math.exp %8 : vector<8x128xf32>
    %cst_7 = arith.constant 1.000000e+00 : f32
    %10 = vector.broadcast %cst_7 : f32 to vector<8x128xf32>
    %11 = arith.addf %10, %9 : vector<8x128xf32>
    %12 = arith.divf %10, %11 : vector<8x128xf32>
    %13 = arith.mulf %7, %12 : vector<8x128xf32>
    %c0_8 = arith.constant 0 : index
    %c0_9 = arith.constant 0 : index
    %c0_10 = arith.constant 0 : index
    %14 = vector.load %arg6[%c0_8, %c0_9, %c0_10] : memref<1x128x128xf32, #tpu.memory_space<vmem>>, vector<1x128x128xf32>
    %15 = vector.shape_cast %14 : vector<1x128x128xf32> to vector<128x128xf32>
    %cst_11 = arith.constant dense<0.000000e+00> : vector<8x128xf32>
    %16 = tpu.matmul %13, %15, %cst_11 {dimension_numbers = #tpu.dot_dimension_numbers<[1], [0], [0], [1], [0, 0, 1, 1], [], []>} : vector<8x128xf32>, vector<128x128xf32>, vector<8x128xf32> -> vector<8x128xf32>
    %c0_12 = arith.constant 0 : index
    %c0_13 = arith.constant 0 : index
    %c0_14 = arith.constant 0 : index
    %17 = vector.load %arg7[%c0_12, %c0_13, %c0_14] : memref<1x1x128xf32, #tpu.memory_space<vmem>>, vector<1x1x128xf32>
    %18 = vector.shape_cast %17 : vector<1x1x128xf32> to vector<1x128xf32>
    %19 = vector.broadcast %18 : vector<1x128xf32> to vector<8x128xf32>
    %20 = arith.addf %16, %19 : vector<8x128xf32>
    %21 = arith.negf %20 : vector<8x128xf32>
    %22 = math.exp %21 : vector<8x128xf32>
    %cst_15 = arith.constant 1.000000e+00 : f32
    %23 = vector.broadcast %cst_15 : f32 to vector<8x128xf32>
    %24 = arith.addf %23, %22 : vector<8x128xf32>
    %25 = arith.divf %23, %24 : vector<8x128xf32>
    %26 = arith.mulf %20, %25 : vector<8x128xf32>
    %c0_16 = arith.constant 0 : index
    %c0_17 = arith.constant 0 : index
    %c0_18 = arith.constant 0 : index
    %27 = vector.load %arg8[%c0_16, %c0_17, %c0_18] : memref<1x128x384xf32, #tpu.memory_space<vmem>>, vector<1x128x384xf32>
    %28 = vector.shape_cast %27 : vector<1x128x384xf32> to vector<128x384xf32>
    %cst_19 = arith.constant dense<0.000000e+00> : vector<8x384xf32>
    %29 = tpu.matmul %26, %28, %cst_19 {dimension_numbers = #tpu.dot_dimension_numbers<[1], [0], [0], [1], [0, 0, 1, 1], [], []>} : vector<8x128xf32>, vector<128x384xf32>, vector<8x384xf32> -> vector<8x384xf32>
    %c0_20 = arith.constant 0 : index
    %c0_21 = arith.constant 0 : index
    %c0_22 = arith.constant 0 : index
    %30 = vector.load %arg9[%c0_20, %c0_21, %c0_22] : memref<1x1x384xf32, #tpu.memory_space<vmem>>, vector<1x1x384xf32>
    %31 = vector.shape_cast %30 : vector<1x1x384xf32> to vector<1x384xf32>
    %32 = vector.broadcast %31 : vector<1x384xf32> to vector<8x384xf32>
    %33 = arith.addf %29, %32 : vector<8x384xf32>
    %34 = vector.extract_strided_slice %33 {offsets = [0, 0], sizes = [8, 128], strides = [1, 1]} : vector<8x384xf32> to vector<8x128xf32>
    %35 = vector.extract_strided_slice %33 {offsets = [0, 128], sizes = [8, 128], strides = [1, 1]} : vector<8x384xf32> to vector<8x128xf32>
    %36 = vector.extract_strided_slice %33 {offsets = [0, 256], sizes = [8, 128], strides = [1, 1]} : vector<8x384xf32> to vector<8x128xf32>
    %c0_23 = arith.constant 0 : index
    %c0_24 = arith.constant 0 : index
    %37 = vector.load %arg10[%c0_23, %c0_24] : memref<1x128xf32, #tpu.memory_space<vmem>>, vector<1x128xf32>
    %c0_25 = arith.constant 0 : index
    %c0_26 = arith.constant 0 : index
    %38 = vector.load %arg11[%c0_25, %c0_26] : memref<1x128xf32, #tpu.memory_space<vmem>>, vector<1x128xf32>
    %39 = vector.broadcast %37 : vector<1x128xf32> to vector<8x128xf32>
    %40 = arith.subf %39, %35 : vector<8x128xf32>
    %cst_27 = arith.constant 0.000000e+00 : f32
    %41 = vector.broadcast %cst_27 : f32 to vector<8x128xf32>
    %42 = arith.maximumf %40, %41 : vector<8x128xf32>
    %43 = math.absf %40 : vector<8x128xf32>
    %cst_28 = arith.constant 0.000000e+00 : f32
    %44 = vector.broadcast %cst_28 : f32 to vector<8x128xf32>
    %45 = arith.subf %44, %43 : vector<8x128xf32>
    %46 = math.exp %45 : vector<8x128xf32>
    %47 = math.log1p %46 : vector<8x128xf32>
    %48 = arith.addf %42, %47 : vector<8x128xf32>
    %49 = vector.broadcast %37 : vector<1x128xf32> to vector<8x128xf32>
    %50 = arith.subf %49, %48 : vector<8x128xf32>
    %51 = vector.broadcast %38 : vector<1x128xf32> to vector<8x128xf32>
    %52 = arith.subf %50, %51 : vector<8x128xf32>
    %cst_29 = arith.constant 0.000000e+00 : f32
    %53 = vector.broadcast %cst_29 : f32 to vector<8x128xf32>
    %54 = arith.maximumf %52, %53 : vector<8x128xf32>
    %55 = math.absf %52 : vector<8x128xf32>
    %cst_30 = arith.constant 0.000000e+00 : f32
    %56 = vector.broadcast %cst_30 : f32 to vector<8x128xf32>
    %57 = arith.subf %56, %55 : vector<8x128xf32>
    %58 = math.exp %57 : vector<8x128xf32>
    %59 = math.log1p %58 : vector<8x128xf32>
    %60 = arith.addf %54, %59 : vector<8x128xf32>
    %61 = vector.broadcast %38 : vector<1x128xf32> to vector<8x128xf32>
    %62 = arith.addf %61, %60 : vector<8x128xf32>
    %cst_31 = arith.constant 5.000000e-01 : f32
    %63 = vector.broadcast %cst_31 : f32 to vector<8x128xf32>
    %64 = arith.mulf %63, %62 : vector<8x128xf32>
    %65 = math.exp %64 : vector<8x128xf32>
    %c0_32 = arith.constant 0 : index
    %c0_33 = arith.constant 0 : index
    %66 = vector.load %arg3[%c0_32, %c0_33] : memref<8x128xf32, #tpu.memory_space<vmem>>, vector<8x128xf32>
    %67 = arith.mulf %66, %65 : vector<8x128xf32>
    %68 = arith.addf %34, %67 : vector<8x128xf32>
    %69 = tpu.iota {dimensions = array<i32: 1>} : vector<8x128xi32>
    %c8_i32 = arith.constant 8 : i32
    %70 = vector.broadcast %c8_i32 : i32 to vector<8x128xi32>
    %71 = arith.cmpi slt, %69, %70 : vector<8x128xi32>
    %72 = arith.select %71, %68, %36 : vector<8x128xi1>, vector<8x128xf32>
    %c0_34 = arith.constant 0 : index
    %c0_35 = arith.constant 0 : index
    %73 = vector.load %arg12[%c0_34, %c0_35] : memref<8x128xf32, #tpu.memory_space<vmem>>, vector<8x128xf32>
    tpu.vector_store %arg12[%c0_34, %c0_35], %72 {strides = array<i32>} : memref<8x128xf32, #tpu.memory_space<vmem>>, vector<8x128xf32>,
    return
  }
  func.func @transform_0(%arg0: i32, %arg1: memref<1xi32, #tpu.memory_space<smem>>) -> (i32, i32) {
    %c0_i32 = arith.constant 0 : i32
    %c0_i32_0 = arith.constant 0 : i32
    return %arg0, %c0_i32 : i32, i32
  }
  func.func @transform_1(%arg0: i32, %arg1: memref<1xi32, #tpu.memory_space<smem>>) -> (i32, i32) {
    %c0_i32 = arith.constant 0 : i32
    %c0_i32_0 = arith.constant 0 : i32
    return %arg0, %c0_i32 : i32, i32
  }
  func.func @transform_2(%arg0: i32, %arg1: memref<1xi32, #tpu.memory_space<smem>>) -> (i32, i32, i32) {
    %c0 = arith.constant 0 : index
    %0 = memref.load %arg1[%c0] : memref<1xi32, #tpu.memory_space<smem>>
    %c0_i32 = arith.constant 0 : i32
    %c0_i32_0 = arith.constant 0 : i32
    %c0_i32_1 = arith.constant 0 : i32
    return %0, %c0_i32, %c0_i32_0 : i32, i32, i32
  }
  func.func @transform_3(%arg0: i32, %arg1: memref<1xi32, #tpu.memory_space<smem>>) -> (i32, i32, i32) {
    %c0 = arith.constant 0 : index
    %0 = memref.load %arg1[%c0] : memref<1xi32, #tpu.memory_space<smem>>
    %c0_i32 = arith.constant 0 : i32
    %c0_i32_0 = arith.constant 0 : i32
    %c0_i32_1 = arith.constant 0 : i32
    return %0, %c0_i32, %c0_i32_0 : i32, i32, i32
  }
  func.func @transform_4(%arg0: i32, %arg1: memref<1xi32, #tpu.memory_space<smem>>) -> (i32, i32, i32) {
    %c0 = arith.constant 0 : index
    %0 = memref.load %arg1[%c0] : memref<1xi32, #tpu.memory_space<smem>>
    %c0_i32 = arith.constant 0 : i32
    %c0_i32_0 = arith.constant 0 : i32
    %c0_i32_1 = arith.constant 0 : i32
    return %0, %c0_i32, %c0_i32_0 : i32, i32, i32
  }
  func.func @transform_5(%arg0: i32, %arg1: memref<1xi32, #tpu.memory_space<smem>>) -> (i32, i32, i32) {
    %c0 = arith.constant 0 : index
    %0 = memref.load %arg1[%c0] : memref<1xi32, #tpu.memory_space<smem>>
    %c0_i32 = arith.constant 0 : i32
    %c0_i32_0 = arith.constant 0 : i32
    %c0_i32_1 = arith.constant 0 : i32
    return %0, %c0_i32, %c0_i32_0 : i32, i32, i32
  }
  func.func @transform_6(%arg0: i32, %arg1: memref<1xi32, #tpu.memory_space<smem>>) -> (i32, i32, i32) {
    %c0 = arith.constant 0 : index
    %0 = memref.load %arg1[%c0] : memref<1xi32, #tpu.memory_space<smem>>
    %c0_i32 = arith.constant 0 : i32
    %c0_i32_0 = arith.constant 0 : i32
    %c0_i32_1 = arith.constant 0 : i32
    return %0, %c0_i32, %c0_i32_0 : i32, i32, i32
  }
  func.func @transform_7(%arg0: i32, %arg1: memref<1xi32, #tpu.memory_space<smem>>) -> (i32, i32, i32) {
    %c0 = arith.constant 0 : index
    %0 = memref.load %arg1[%c0] : memref<1xi32, #tpu.memory_space<smem>>
    %c0_i32 = arith.constant 0 : i32
    %c0_i32_0 = arith.constant 0 : i32
    %c0_i32_1 = arith.constant 0 : i32
    return %0, %c0_i32, %c0_i32_0 : i32, i32, i32
  }
  func.func @transform_8(%arg0: i32, %arg1: memref<1xi32, #tpu.memory_space<smem>>) -> (i32, i32) {
    %c0_i32 = arith.constant 0 : i32
    %c0_i32_0 = arith.constant 0 : i32
    %c0_i32_1 = arith.constant 0 : i32
    return %c0_i32, %c0_i32_0 : i32, i32
  }
  func.func @transform_9(%arg0: i32, %arg1: memref<1xi32, #tpu.memory_space<smem>>) -> (i32, i32) {
    %c0_i32 = arith.constant 0 : i32
    %c0_i32_0 = arith.constant 0 : i32
    %c0_i32_1 = arith.constant 0 : i32
    return %c0_i32, %c0_i32_0 : i32, i32
  }
  func.func @transform_10(%arg0: i32, %arg1: memref<1xi32, #tpu.memory_space<smem>>) -> (i32, i32) {
    %c0_i32 = arith.constant 0 : i32
    %c0_i32_0 = arith.constant 0 : i32
    return %arg0, %c0_i32 : i32, i32
  }
}

</mosaic_0001>

<llo_original>
// kernel: pets_model_forward.1
$region0: #{pets_model_forward.1}
  #allocation0 [shape = 'u32[]', space=smem, size = 0x4, offset = 0x4, fixed_abs, tag = 'smem constant byte address 0x4 - core index']
  #allocation1 [shape = 'u32[144,128]{1,0:T(1,128)}', space=vmem, size = 0x12000, scoped, tag = 'internal scratch']
  #allocation2 [shape = 's32[1]{0}', space=sflag, size = 0x4, scoped, tag = 'scoped memory for pets_model_forward.1']
  #allocation3 [shape = 's32[1]{0:T(128)S(6)}', space=smem, size = 0x200, scoped, tag = 'prefetched SMEM operand 0']
  %s0 = inlined_call_operand.<no memory space> [shape: s32[1], index: 0, kind: input, shape index: {}]
  %s1 = inlined_call_operand.vmem [shape: f32[8,128], index: 1, kind: input, shape index: {}]
  %s2 = inlined_call_operand.vmem [shape: f32[8,128], index: 2, kind: input, shape index: {}]
  %s3 = inlined_call_operand.hbm [shape: f32[2,128,128], index: 3, kind: input, shape index: {}]
  %s4 = inlined_call_operand.vmem [shape: f32[2,1,128], index: 4, kind: input, shape index: {}]
  %s5 = inlined_call_operand.hbm [shape: f32[2,128,128], index: 5, kind: input, shape index: {}]
  %s6 = inlined_call_operand.vmem [shape: f32[2,1,128], index: 6, kind: input, shape index: {}]
  %s7 = inlined_call_operand.hbm [shape: f32[2,128,384], index: 7, kind: input, shape index: {}]
  %s8 = inlined_call_operand.vmem [shape: f32[2,1,384], index: 8, kind: input, shape index: {}]
  %s9 = inlined_call_operand.vmem [shape: f32[1,128], index: 9, kind: input, shape index: {}]
  %s10 = inlined_call_operand.vmem [shape: f32[1,128], index: 10, kind: input, shape index: {}]
  %s11 = inlined_call_operand.vmem [shape: f32[8,128], index: 11, kind: output, shape index: {}]
  %s12 = sld [smem:[#allocation0]]
  $region62: #{pets_model_forward.1} parent=0
    _
  %s14 = ssub.s32 1, %s12
  %s15 = scalar_select 0, %s14, %s12
  %16 = sst [smem:[#allocation3]] %s0
  $region1: #{pets_model_forward.1} parent=0
    #allocation4 [shape = 'u8[65536]{0}', space=vmem, size = 0x10000, scoped, tag = 'input window, operand 3, single buffered']
    #allocation5 [shape = 's32[1]{0}', space=sflag, size = 0x4, scoped, tag = 'scoped memory for pets_model_forward.1']
    #allocation6 [shape = 'u8[65536]{0}', space=vmem, size = 0x10000, scoped, tag = 'input window, operand 5, single buffered']
    #allocation7 [shape = 's32[1]{0}', space=sflag, size = 0x4, scoped, tag = 'scoped memory for pets_model_forward.1']
    #allocation8 [shape = 'u8[196608]{0}', space=vmem, size = 0x30000, scoped, tag = 'input window, operand 7, single buffered']
    %17 = vsyncpa [#allocation5], 0
    %18 = vsyncpa [#allocation7], 0
    // Predicated region
    $region2: #{pets_model_forward.1} parent=1 // pred_check
      _
    $region3: #{pets_model_forward.1} parent=1 // pred_check_branch
      %20 = sbr.rel (0) target = $region5
    $region4: #{pets_model_forward.1} parent=1 // pred_region
      _
    $region5: #{pets_model_forward.1} parent=1 // pred_fallthru
      _
    // Predicated region
    $region6: #{pets_model_forward.1} parent=1 // pred_check
      _
    $region7: #{pets_model_forward.1} parent=1 // pred_check_branch
      %22 = sbr.rel (0) target = $region9
    $region8: #{pets_model_forward.1} parent=1 // pred_region
      _
    $region9: #{pets_model_forward.1} parent=1 // pred_fallthru
      _
    // Predicated region
    $region10: #{pets_model_forward.1} parent=1 // pred_check
      _
    $region11: #{pets_model_forward.1} parent=1 // pred_check_branch
      %24 = sbr.rel (0) target = $region13
    $region12: #{pets_model_forward.1} parent=1 // pred_region
      %s25 = sld [smem:[#allocation3]]
      %s27 = ssub.s32 2048, 2048
      %28 = vsyncadd [#allocation5], %s27
      %s29 = smul.addr %s25, 16
      %s30 = smul.addr %s29, 128
      %s31 = scalar_lea.hbm %s3, %s30
      %s32 = sshll.u32 [#allocation4], 4
      %s33 = int_to_ptr.vmem [resolvable:$true] %s32
      %38 = dma.hbm_to_vmem [thread:$0]  %s31, 2048, %s33, [#allocation5], 128, 128, 8
    $region13: #{pets_model_forward.1} parent=1 // pred_fallthru
      _
    // Predicated region
    $region14: #{pets_model_forward.1} parent=1 // pred_check
      _
    $region15: #{pets_model_forward.1} parent=1 // pred_check_branch
      %40 = sbr.rel (0) target = $region17
    $region16: #{pets_model_forward.1} parent=1 // pred_region
      %s41 = sld [smem:[#allocation3]]
      %p42 = scmp.lt.s32.totalorder %s41, 1
      %s43 = scalar_select %p42, %s41, 1
      %s44 = scalar_lea.vmem %s4, %s43
      %s45 = sld [smem:[#allocation3]]
    $region17: #{pets_model_forward.1} parent=1 // pred_fallthru
      _
    // Predicated region
    $region18: #{pets_model_forward.1} parent=1 // pred_check
      _
    $region19: #{pets_model_forward.1} parent=1 // pred_check_branch
      %47 = sbr.rel (0) target = $region21
    $region20: #{pets_model_forward.1} parent=1 // pred_region
      %s48 = sld [smem:[#allocation3]]
      %s50 = ssub.s32 2048, 2048
      %51 = vsyncadd [#allocation7], %s50
      %s52 = smul.addr %s48, 16
      %s53 = smul.addr %s52, 128
      %s54 = scalar_lea.hbm %s5, %s53
      %s55 = sshll.u32 [#allocation6], 4
      %s56 = int_to_ptr.vmem [resolvable:$true] %s55
      %61 = dma.hbm_to_vmem [thread:$0]  %s54, 2048, %s56, [#allocation7], 128, 128, 8
    $region21: #{pets_model_forward.1} parent=1 // pred_fallthru
      _
    // Predicated region
    $region22: #{pets_model_forward.1} parent=1 // pred_check
      _
    $region23: #{pets_model_forward.1} parent=1 // pred_check_branch
      %63 = sbr.rel (0) target = $region25
    $region24: #{pets_model_forward.1} parent=1 // pred_region
      %s64 = sld [smem:[#allocation3]]
      %p65 = scmp.lt.s32.totalorder %s64, 1
      %s66 = scalar_select %p65, %s64, 1
      %s67 = scalar_lea.vmem %s6, %s66
      %s68 = sld [smem:[#allocation3]]
    $region25: #{pets_model_forward.1} parent=1 // pred_fallthru
      _
    // Predicated region
    $region26: #{pets_model_forward.1} parent=1 // pred_check
      _
    $region27: #{pets_model_forward.1} parent=1 // pred_check_branch
      %70 = sbr.rel (0) target = $region29
    $region28: #{pets_model_forward.1} parent=1 // pred_region
      %s71 = sld [smem:[#allocation3]]
      %s73 = ssub.s32 6144, 6144
      %74 = vsyncadd [#allocation7], %s73
      %s75 = smul.addr %s71, 48
      %s76 = smul.addr %s75, 128
      %s77 = scalar_lea.hbm %s7, %s76
      %s78 = sshll.u32 [#allocation8], 4
      %s79 = int_to_ptr.vmem [resolvable:$true] %s78
      %84 = dma.hbm_to_vmem [thread:$0]  %s77, 6144, %s79, [#allocation7], 384, 384, 24
    $region29: #{pets_model_forward.1} parent=1 // pred_fallthru
      _
    // Predicated region
    $region30: #{pets_model_forward.1} parent=1 // pred_check
      _
    $region31: #{pets_model_forward.1} parent=1 // pred_check_branch
      %86 = sbr.rel (0) target = $region33
    $region32: #{pets_model_forward.1} parent=1 // pred_region
      %s87 = sld [smem:[#allocation3]]
      %p88 = scmp.lt.s32.totalorder %s87, 1
      %s89 = scalar_select %p88, %s87, 1
      %s90 = smul.addr %s89, 3
      %s91 = scalar_lea.vmem %s8, %s90
      %s92 = sld [smem:[#allocation3]]
    $region33: #{pets_model_forward.1} parent=1 // pred_fallthru
      _
    // Predicated region
    $region34: #{pets_model_forward.1} parent=1 // pred_check
      _
    $region35: #{pets_model_forward.1} parent=1 // pred_check_branch
      %94 = sbr.rel (0) target = $region37
    $region36: #{pets_model_forward.1} parent=1 // pred_region
      _
    $region37: #{pets_model_forward.1} parent=1 // pred_fallthru
      _
    // Predicated region
    $region38: #{pets_model_forward.1} parent=1 // pred_check
      _
    $region39: #{pets_model_forward.1} parent=1 // pred_check_branch
      %96 = sbr.rel (0) target = $region41
    $region40: #{pets_model_forward.1} parent=1 // pred_region
      _
    $region41: #{pets_model_forward.1} parent=1 // pred_fallthru
      _
    // Predicated region
    $region42: #{pets_model_forward.1} parent=1 // pred_check
      _
    $region43: #{pets_model_forward.1} parent=1 // pred_check_branch
      %98 = sbr.rel (0) target = $region45
    $region44: #{pets_model_forward.1} parent=1 // pred_region
      %99 = dma.done [#allocation5], 2048
    $region45: #{pets_model_forward.1} parent=1 // pred_fallthru
      _
    // Predicated region
    $region46: #{pets_model_forward.1} parent=1 // pred_check
      _
    $region47: #{pets_model_forward.1} parent=1 // pred_check_branch
      %101 = sbr.rel (0) target = $region49
    $region48: #{pets_model_forward.1} parent=1 // pred_region
      %102 = dma.done [#allocation7], 2048
    $region49: #{pets_model_forward.1} parent=1 // pred_fallthru
      _
    // Predicated region
    $region50: #{pets_model_forward.1} parent=1 // pred_check
      _
    $region51: #{pets_model_forward.1} parent=1 // pred_check_branch
      %104 = sbr.rel (0) target = $region53
    $region52: #{pets_model_forward.1} parent=1 // pred_region
      %105 = dma.done [#allocation7], 6144
    $region53: #{pets_model_forward.1} parent=1 // pred_fallthru
      _
    %s106 = sld [smem:[#allocation3]]
    %p107 = scmp.lt.s32.totalorder %s106, 1
    %s108 = scalar_select %p107, %s106, 1
    %s109 = scalar_lea.vmem %s4, %s108
    %s110 = sld [smem:[#allocation3]]
    %p111 = scmp.lt.s32.totalorder %s110, 1
    %s112 = scalar_select %p111, %s110, 1
    %s113 = scalar_lea.vmem %s6, %s112
    %s114 = sld [smem:[#allocation3]]
    %p115 = scmp.lt.s32.totalorder %s114, 1
    %s116 = scalar_select %p115, %s114, 1
    %s117 = smul.addr %s116, 3
    %s118 = scalar_lea.vmem %s8, %s117
    %s119 = sld [smem:[#allocation3]]
    %s120 = sld [smem:[#allocation3]]
    %p121 = scmp.lt.s32.totalorder %s120, 1
    %s122 = scalar_select %p121, %s120, 1
    %s123 = scalar_lea.vmem %s4, %s122
    %s124 = sld [smem:[#allocation3]]
    %s125 = sld [smem:[#allocation3]]
    %s126 = sld [smem:[#allocation3]]
    %p127 = scmp.lt.s32.totalorder %s126, 1
    %s128 = scalar_select %p127, %s126, 1
    %s129 = scalar_lea.vmem %s6, %s128
    %s130 = sld [smem:[#allocation3]]
    %s131 = sld [smem:[#allocation3]]
    %s132 = sld [smem:[#allocation3]]
    %p133 = scmp.lt.s32.totalorder %s132, 1
    %s134 = scalar_select %p133, %s132, 1
    %s135 = smul.addr %s134, 3
    %s136 = scalar_lea.vmem %s8, %s135
    %s137 = sld [smem:[#allocation3]]
    %v138 = vld [vmem:[%s1] sm:$0xff]
    %v139 = vld [vmem:[#allocation4] sm:$0xff]
    %v140 = vld [vmem:[#allocation4 + $0x8] sm:$0xff]
    %v141 = vld [vmem:[#allocation4 + $0x10] sm:$0xff]
    %v142 = vld [vmem:[#allocation4 + $0x18] sm:$0xff]
    %v143 = vld [vmem:[#allocation4 + $0x20] sm:$0xff]
    %v144 = vld [vmem:[#allocation4 + $0x28] sm:$0xff]
    %v145 = vld [vmem:[#allocation4 + $0x30] sm:$0xff]
    %v146 = vld [vmem:[#allocation4 + $0x38] sm:$0xff]
    %v147 = vld [vmem:[#allocation4 + $0x40] sm:$0xff]
    %v148 = vld [vmem:[#allocation4 + $0x48] sm:$0xff]
    %v149 = vld [vmem:[#allocation4 + $0x50] sm:$0xff]
    %v150 = vld [vmem:[#allocation4 + $0x58] sm:$0xff]
    %v151 = vld [vmem:[#allocation4 + $0x60] sm:$0xff]
    %v152 = vld [vmem:[#allocation4 + $0x68] sm:$0xff]
    %v153 = vld [vmem:[#allocation4 + $0x70] sm:$0xff]
    %v154 = vld [vmem:[#allocation4 + $0x78] sm:$0xff]
    %v155 = vld [vmem:[%s123] sm:$0x1]
    %v157 = vlaneseq
    %v158 = vshrl.u32 %v157, 7
    %v159 = vsub.s32 0, %v158
    %v160 = vrot.slane %v155, %v159
    %162 = vmatprep.subr.mxu0 0.0
    %163 = vmatpush1.msra.mxu0 %v139
    %164 = vmatprep.subr.mxu0 0.0
    %165 = vmatpush1.msra.mxu0 %v140
    %166 = vmatprep.subr.mxu0 0.0
    %167 = vmatpush1.msra.mxu0 %v141
    %168 = vmatprep.subr.mxu0 0.0
    %169 = vmatpush1.msra.mxu0 %v142
    %170 = vmatprep.subr.mxu0 0.0
    %171 = vmatpush1.msra.mxu0 %v143
    %172 = vmatprep.subr.mxu0 0.0
    %173 = vmatpush1.msra.mxu0 %v144
    %174 = vmatprep.subr.mxu0 0.0
    %175 = vmatpush1.msra.mxu0 %v145
    %176 = vmatprep.subr.mxu0 0.0
    %177 = vmatpush1.msra.mxu0 %v146
    %178 = vmatprep.subr.mxu0 0.0
    %179 = vmatpush1.msra.mxu0 %v147
    %180 = vmatprep.subr.mxu0 0.0
    %181 = vmatpush1.msra.mxu0 %v148
    %182 = vmatprep.subr.mxu0 0.0
    %183 = vmatpush1.msra.mxu0 %v149
    %184 = vmatprep.subr.mxu0 0.0
    %185 = vmatpush1.msra.mxu0 %v150
    %186 = vmatprep.subr.mxu0 0.0
    %187 = vmatpush1.msra.mxu0 %v151
    %188 = vmatprep.subr.mxu0 0.0
    %189 = vmatpush1.msra.mxu0 %v152
    %190 = vmatprep.subr.mxu0 0.0
    %191 = vmatpush1.msra.mxu0 %v153
    %192 = vmatprep.subr.mxu0 0.0
    %193 = vmatpush1.msra.mxu0 %v154
    %194 = vmatprep.subr.mxu0 0.0
    %195 = vmatpush1.msra.mxu0 0.0
    %196 = vmatprep.subr.mxu0 0.0
    %197 = vmatpush1.msra.mxu0 0.0
    %198 = vmatprep.subr.mxu0 0.0
    %199 = vmatpush1.msra.mxu0 0.0
    %200 = vmatprep.subr.mxu0 0.0
    %201 = vmatpush1.msra.mxu0 0.0
    %202 = vmatprep.subr.mxu0 0.0
    %203 = vmatpush1.msra.mxu0 0.0
    %204 = vmatprep.subr.mxu0 0.0
    %205 = vmatpush1.msra.mxu0 0.0
    %206 = vmatprep.subr.mxu0 0.0
    %207 = vmatpush1.msra.mxu0 0.0
    %208 = vmatprep.subr.mxu0 0.0
    %209 = vmatpush1.msra.mxu0 0.0
    %210 = vmatprep.subr.mxu0 0.0
    %211 = vmatpush1.msra.mxu0 0.0
    %212 = vmatprep.subr.mxu0 0.0
    %213 = vmatpush1.msra.mxu0 0.0
    %214 = vmatprep.subr.mxu0 0.0
    %215 = vmatpush1.msra.mxu0 0.0
    %216 = vmatprep.subr.mxu0 0.0
    %217 = vmatpush1.msra.mxu0 0.0
    %218 = vmatprep.subr.mxu0 0.0
    %219 = vmatpush1.msra.mxu0 0.0
    %220 = vmatprep.subr.mxu0 0.0
    %221 = vmatpush1.msra.mxu0 0.0
    %222 = vmatprep.subr.mxu0 0.0
    %223 = vmatpush1.msra.mxu0 0.0
    %224 = vmatprep.subr.mxu0 0.0
    %225 = vmatpush1.msra.mxu0 0.0
    %226 = vmatprep.mubr.f32.mxu0 0.0
    %227 = vmatmul.mubr.f32.gmra.mrb[0].mxu0 %v138
    %v228 = vpop.f32.mrb[0].mxu0
    %v229 = vadd.f32 %v160, %v228
    %v230 = vpop.f32.mrb[0].mxu0
    %231 = vdwg.mxu0
    %v232 = vxor.u32 %v229, 2147483648
    %v233 = vmul.f32 %v232, 1.442695
    %v234 = vpow.pop %v233
    %v235 = vadd.f32 %v234, 1.0
    %v236 = vrcp.pop %v235
    %v237 = vmul.f32 1.0, %v236
    %v238 = vmul.f32 %v229, %v237
    %v239 = vld [vmem:[#allocation6] sm:$0xff]
    %v240 = vld [vmem:[#allocation6 + $0x8] sm:$0xff]
    %v241 = vld [vmem:[#allocation6 + $0x10] sm:$0xff]
    %v242 = vld [vmem:[#allocation6 + $0x18] sm:$0xff]
    %v243 = vld [vmem:[#allocation6 + $0x20] sm:$0xff]
    %v244 = vld [vmem:[#allocation6 + $0x28] sm:$0xff]
    %v245 = vld [vmem:[#allocation6 + $0x30] sm:$0xff]
    %v246 = vld [vmem:[#allocation6 + $0x38] sm:$0xff]
    %v247 = vld [vmem:[#allocation6 + $0x40] sm:$0xff]
    %v248 = vld [vmem:[#allocation6 + $0x48] sm:$0xff]
    %v249 = vld [vmem:[#allocation6 + $0x50] sm:$0xff]
    %v250 = vld [vmem:[#allocation6 + $0x58] sm:$0xff]
    %v251 = vld [vmem:[#allocation6 + $0x60] sm:$0xff]
    %v252 = vld [vmem:[#allocation6 + $0x68] sm:$0xff]
    %v253 = vld [vmem:[#allocation6 + $0x70] sm:$0xff]
    %v254 = vld [vmem:[#allocation6 + $0x78] sm:$0xff]
    %v255 = vld [vmem:[%s129] sm:$0x1]
    %v257 = vlaneseq
    %v258 = vshrl.u32 %v257, 7
    %v259 = vsub.s32 0, %v258
    %v260 = vrot.slane %v255, %v259
    %262 = vmatprep.subr.mxu0 0.0
    %263 = vmatpush1.msra.mxu0 %v239
    %264 = vmatprep.subr.mxu0 0.0
    %265 = vmatpush1.msra.mxu0 %v240
    %266 = vmatprep.subr.mxu0 0.0
    %267 = vmatpush1.msra.mxu0 %v241
    %268 = vmatprep.subr.mxu0 0.0
    %269 = vmatpush1.msra.mxu0 %v242
    %270 = vmatprep.subr.mxu0 0.0
    %271 = vmatpush1.msra.mxu0 %v243
    %272 = vmatprep.subr.mxu0 0.0
    %273 = vmatpush1.msra.mxu0 %v244
    %274 = vmatprep.subr.mxu0 0.0
    %275 = vmatpush1.msra.mxu0 %v245
    %276 = vmatprep.subr.mxu0 0.0
    %277 = vmatpush1.msra.mxu0 %v246
    %278 = vmatprep.subr.mxu0 0.0
    %279 = vmatpush1.msra.mxu0 %v247
    %280 = vmatprep.subr.mxu0 0.0
    %281 = vmatpush1.msra.mxu0 %v248
    %282 = vmatprep.subr.mxu0 0.0
    %283 = vmatpush1.msra.mxu0 %v249
    %284 = vmatprep.subr.mxu0 0.0
    %285 = vmatpush1.msra.mxu0 %v250
    %286 = vmatprep.subr.mxu0 0.0
    %287 = vmatpush1.msra.mxu0 %v251
    %288 = vmatprep.subr.mxu0 0.0
    %289 = vmatpush1.msra.mxu0 %v252
    %290 = vmatprep.subr.mxu0 0.0
    %291 = vmatpush1.msra.mxu0 %v253
    %292 = vmatprep.subr.mxu0 0.0
    %293 = vmatpush1.msra.mxu0 %v254
    %294 = vmatprep.subr.mxu0 0.0
    %295 = vmatpush1.msra.mxu0 0.0
    %296 = vmatprep.subr.mxu0 0.0
    %297 = vmatpush1.msra.mxu0 0.0
    %298 = vmatprep.subr.mxu0 0.0
    %299 = vmatpush1.msra.mxu0 0.0
    %300 = vmatprep.subr.mxu0 0.0
    %301 = vmatpush1.msra.mxu0 0.0
    %302 = vmatprep.subr.mxu0 0.0
    %303 = vmatpush1.msra.mxu0 0.0
    %304 = vmatprep.subr.mxu0 0.0
    %305 = vmatpush1.msra.mxu0 0.0
    %306 = vmatprep.subr.mxu0 0.0
    %307 = vmatpush1.msra.mxu0 0.0
    %308 = vmatprep.subr.mxu0 0.0
    %309 = vmatpush1.msra.mxu0 0.0
    %310 = vmatprep.subr.mxu0 0.0
    %311 = vmatpush1.msra.mxu0 0.0
    %312 = vmatprep.subr.mxu0 0.0
    %313 = vmatpush1.msra.mxu0 0.0
    %314 = vmatprep.subr.mxu0 0.0
    %315 = vmatpush1.msra.mxu0 0.0
    %316 = vmatprep.subr.mxu0 0.0
    %317 = vmatpush1.msra.mxu0 0.0
    %318 = vmatprep.subr.mxu0 0.0
    %319 = vmatpush1.msra.mxu0 0.0
    %320 = vmatprep.subr.mxu0 0.0
    %321 = vmatpush1.msra.mxu0 0.0
    %322 = vmatprep.subr.mxu0 0.0
    %323 = vmatpush1.msra.mxu0 0.0
    %324 = vmatprep.subr.mxu0 0.0
    %325 = vmatpush1.msra.mxu0 0.0
    %326 = vmatprep.mubr.f32.mxu0 0.0
    %327 = vmatmul.mubr.f32.gmra.mrb[0].mxu0 %v238
    %v328 = vpop.f32.mrb[0].mxu0
    %v329 = vadd.f32 %v260, %v328
    %v330 = vpop.f32.mrb[0].mxu0
    %331 = vdwg.mxu0
    %v332 = vxor.u32 %v329, 2147483648
    %v333 = vmul.f32 %v332, 1.442695
    %v334 = vpow.pop %v333
    %v335 = vadd.f32 %v334, 1.0
    %v336 = vrcp.pop %v335
    %v337 = vmul.f32 1.0, %v336
    %v338 = vmul.f32 %v329, %v337
    %v339 = vld [vmem:[#allocation8] sm:$0xff]
    %v340 = vld [vmem:[#allocation8 + $0x8] sm:$0xff]
    %v341 = vld [vmem:[#allocation8 + $0x10] sm:$0xff]
    %v342 = vld [vmem:[#allocation8 + $0x18] sm:$0xff]
    %v343 = vld [vmem:[#allocation8 + $0x20] sm:$0xff]
    %v344 = vld [vmem:[#allocation8 + $0x28] sm:$0xff]
    %v345 = vld [vmem:[#allocation8 + $0x30] sm:$0xff]
    %v346 = vld [vmem:[#allocation8 + $0x38] sm:$0xff]
    %v347 = vld [vmem:[#allocation8 + $0x40] sm:$0xff]
    %v348 = vld [vmem:[#allocation8 + $0x48] sm:$0xff]
    %v349 = vld [vmem:[#allocation8 + $0x50] sm:$0xff]
    %v350 = vld [vmem:[#allocation8 + $0x58] sm:$0xff]
    %v351 = vld [vmem:[#allocation8 + $0x60] sm:$0xff]
    %v352 = vld [vmem:[#allocation8 + $0x68] sm:$0xff]
    %v353 = vld [vmem:[#allocation8 + $0x70] sm:$0xff]
    %v354 = vld [vmem:[#allocation8 + $0x78] sm:$0xff]
    %v355 = vld [vmem:[#allocation8 + $0x80] sm:$0xff]
    %v356 = vld [vmem:[#allocation8 + $0x88] sm:$0xff]
    %v357 = vld [vmem:[#allocation8 + $0x90] sm:$0xff]
    %v358 = vld [vmem:[#allocation8 + $0x98] sm:$0xff]
    %v359 = vld [vmem:[#allocation8 + $0xa0] sm:$0xff]
    %v360 = vld [vmem:[#allocation8 + $0xa8] sm:$0xff]
    %v361 = vld [vmem:[#allocation8 + $0xb0] sm:$0xff]
    %v362 = vld [vmem:[#allocation8 + $0xb8] sm:$0xff]
    %v363 = vld [vmem:[#allocation8 + $0xc0] sm:$0xff]
    %v364 = vld [vmem:[#allocation8 + $0xc8] sm:$0xff]
    %v365 = vld [vmem:[#allocation8 + $0xd0] sm:$0xff]
    %v366 = vld [vmem:[#allocation8 + $0xd8] sm:$0xff]
    %v367 = vld [vmem:[#allocation8 + $0xe0] sm:$0xff]
    %v368 = vld [vmem:[#allocation8 + $0xe8] sm:$0xff]
    %v369 = vld [vmem:[#allocation8 + $0xf0] sm:$0xff]
    %v370 = vld [vmem:[#allocation8 + $0xf8] sm:$0xff]
    %v371 = vld [vmem:[#allocation8 + $0x100] sm:$0xff]
    %v372 = vld [vmem:[#allocation8 + $0x108] sm:$0xff]
    %v373 = vld [vmem:[#allocation8 + $0x110] sm:$0xff]
    %v374 = vld [vmem:[#allocation8 + $0x118] sm:$0xff]
    %v375 = vld [vmem:[#allocation8 + $0x120] sm:$0xff]
    %v376 = vld [vmem:[#allocation8 + $0x128] sm:$0xff]
    %v377 = vld [vmem:[#allocation8 + $0x130] sm:$0xff]
    %v378 = vld [vmem:[#allocation8 + $0x138] sm:$0xff]
    %v379 = vld [vmem:[#allocation8 + $0x140] sm:$0xff]
    %v380 = vld [vmem:[#allocation8 + $0x148] sm:$0xff]
    %v381 = vld [vmem:[#allocation8 + $0x150] sm:$0xff]
    %v382 = vld [vmem:[#allocation8 + $0x158] sm:$0xff]
    %v383 = vld [vmem:[#allocation8 + $0x160] sm:$0xff]
    %v384 = vld [vmem:[#allocation8 + $0x168] sm:$0xff]
    %v385 = vld [vmem:[#allocation8 + $0x170] sm:$0xff]
    %v386 = vld [vmem:[#allocation8 + $0x178] sm:$0xff]
    %v387 = vld [vmem:[%s136] sm:$0x7]
    %v389 = vlaneseq
    %v390 = vshrl.u32 %v389, 7
    %v391 = vsub.s32 0, %v390
    %v392 = vrot.slane %v387, %v391
    %v393 = vlaneseq
    %v394 = vshrl.u32 %v393, 7
    %v395 = vsub.s32 1, %v394
    %v396 = vrot.slane %v387, %v395
    %v397 = vlaneseq
    %v398 = vshrl.u32 %v397, 7
    %v399 = vsub.s32 2, %v398
    %v400 = vrot.slane %v387, %v399
    %404 = vmatprep.subr.mxu0 %v340
    %405 = vmatpush1.msra.mxu0 %v339
    %406 = vmatprep.subr.mxu0 %v343
    %407 = vmatpush1.msra.mxu0 %v342
    %408 = vmatprep.subr.mxu0 %v346
    %409 = vmatpush1.msra.mxu0 %v345
    %410 = vmatprep.subr.mxu0 %v349
    %411 = vmatpush1.msra.mxu0 %v348
    %412 = vmatprep.subr.mxu0 %v352
    %413 = vmatpush1.msra.mxu0 %v351
    %414 = vmatprep.subr.mxu0 %v355
    %415 = vmatpush1.msra.mxu0 %v354
    %416 = vmatprep.subr.mxu0 %v358
    %417 = vmatpush1.msra.mxu0 %v357
    %418 = vmatprep.subr.mxu0 %v361
    %419 = vmatpush1.msra.mxu0 %v360
    %420 = vmatprep.subr.mxu0 %v364
    %421 = vmatpush1.msra.mxu0 %v363
    %422 = vmatprep.subr.mxu0 %v367
    %423 = vmatpush1.msra.mxu0 %v366
    %424 = vmatprep.subr.mxu0 %v370
    %425 = vmatpush1.msra.mxu0 %v369
    %426 = vmatprep.subr.mxu0 %v373
    %427 = vmatpush1.msra.mxu0 %v372
    %428 = vmatprep.subr.mxu0 %v376
    %429 = vmatpush1.msra.mxu0 %v375
    %430 = vmatprep.subr.mxu0 %v379
    %431 = vmatpush1.msra.mxu0 %v378
    %432 = vmatprep.subr.mxu0 %v382
    %433 = vmatpush1.msra.mxu0 %v381
    %434 = vmatprep.subr.mxu0 %v385
    %435 = vmatpush1.msra.mxu0 %v384
    %436 = vmatprep.subr.mxu0 0.0
    %437 = vmatpush1.msra.mxu0 0.0
    %438 = vmatprep.subr.mxu0 0.0
    %439 = vmatpush1.msra.mxu0 0.0
    %440 = vmatprep.subr.mxu0 0.0
    %441 = vmatpush1.msra.mxu0 0.0
    %442 = vmatprep.subr.mxu0 0.0
    %443 = vmatpush1.msra.mxu0 0.0
    %444 = vmatprep.subr.mxu0 0.0
    %445 = vmatpush1.msra.mxu0 0.0
    %446 = vmatprep.subr.mxu0 0.0
    %447 = vmatpush1.msra.mxu0 0.0
    %448 = vmatprep.subr.mxu0 0.0
    %449 = vmatpush1.msra.mxu0 0.0
    %450 = vmatprep.subr.mxu0 0.0
    %451 = vmatpush1.msra.mxu0 0.0
    %452 = vmatprep.subr.mxu0 0.0
    %453 = vmatpush1.msra.mxu0 0.0
    %454 = vmatprep.subr.mxu0 0.0
    %455 = vmatpush1.msra.mxu0 0.0
    %456 = vmatprep.subr.mxu0 0.0
    %457 = vmatpush1.msra.mxu0 0.0
    %458 = vmatprep.subr.mxu0 0.0
    %459 = vmatpush1.msra.mxu0 0.0
    %460 = vmatprep.subr.mxu0 0.0
    %461 = vmatpush1.msra.mxu0 0.0
    %462 = vmatprep.subr.mxu0 0.0
    %463 = vmatpush1.msra.mxu0 0.0
    %464 = vmatprep.subr.mxu0 0.0
    %465 = vmatpush1.msra.mxu0 0.0
    %466 = vmatprep.subr.mxu0 0.0
    %467 = vmatpush1.msra.mxu0 0.0
    %468 = vmatprep.mubr.f32.mxu0 0.0
    %469 = vmatmul.mubr.f32.gmra.mrb[0].mxu0 %v338
    %v470 = vpop.f32.mrb[0].mxu0
    %v471 = vadd.f32 %v392, %v470
    %v472 = vpop.f32.mrb[0].mxu0
    %v473 = vadd.f32 %v396, %v472
    %474 = vdwg.mxu0
    %475 = vmatprep.subr.mxu0 0.0
    %476 = vmatpush1.msra.mxu0 %v341
    %477 = vmatprep.subr.mxu0 0.0
    %478 = vmatpush1.msra.mxu0 %v344
    %479 = vmatprep.subr.mxu0 0.0
    %480 = vmatpush1.msra.mxu0 %v347
    %481 = vmatprep.subr.mxu0 0.0
    %482 = vmatpush1.msra.mxu0 %v350
    %483 = vmatprep.subr.mxu0 0.0
    %484 = vmatpush1.msra.mxu0 %v353
    %485 = vmatprep.subr.mxu0 0.0
    %486 = vmatpush1.msra.mxu0 %v356
    %487 = vmatprep.subr.mxu0 0.0
    %488 = vmatpush1.msra.mxu0 %v359
    %489 = vmatprep.subr.mxu0 0.0
    %490 = vmatpush1.msra.mxu0 %v362
    %491 = vmatprep.subr.mxu0 0.0
    %492 = vmatpush1.msra.mxu0 %v365
    %493 = vmatprep.subr.mxu0 0.0
    %494 = vmatpush1.msra.mxu0 %v368
    %495 = vmatprep.subr.mxu0 0.0
    %496 = vmatpush1.msra.mxu0 %v371
    %497 = vmatprep.subr.mxu0 0.0
    %498 = vmatpush1.msra.mxu0 %v374
    %499 = vmatprep.subr.mxu0 0.0
    %500 = vmatpush1.msra.mxu0 %v377
    %501 = vmatprep.subr.mxu0 0.0
    %502 = vmatpush1.msra.mxu0 %v380
    %503 = vmatprep.subr.mxu0 0.0
    %504 = vmatpush1.msra.mxu0 %v383
    %505 = vmatprep.subr.mxu0 0.0
    %506 = vmatpush1.msra.mxu0 %v386
    %507 = vmatprep.subr.mxu0 0.0
    %508 = vmatpush1.msra.mxu0 0.0
    %509 = vmatprep.subr.mxu0 0.0
    %510 = vmatpush1.msra.mxu0 0.0
    %511 = vmatprep.subr.mxu0 0.0
    %512 = vmatpush1.msra.mxu0 0.0
    %513 = vmatprep.subr.mxu0 0.0
    %514 = vmatpush1.msra.mxu0 0.0
    %515 = vmatprep.subr.mxu0 0.0
    %516 = vmatpush1.msra.mxu0 0.0
    %517 = vmatprep.subr.mxu0 0.0
    %518 = vmatpush1.msra.mxu0 0.0
    %519 = vmatprep.subr.mxu0 0.0
    %520 = vmatpush1.msra.mxu0 0.0
    %521 = vmatprep.subr.mxu0 0.0
    %522 = vmatpush1.msra.mxu0 0.0
    %523 = vmatprep.subr.mxu0 0.0
    %524 = vmatpush1.msra.mxu0 0.0
    %525 = vmatprep.subr.mxu0 0.0
    %526 = vmatpush1.msra.mxu0 0.0
    %527 = vmatprep.subr.mxu0 0.0
    %528 = vmatpush1.msra.mxu0 0.0
    %529 = vmatprep.subr.mxu0 0.0
    %530 = vmatpush1.msra.mxu0 0.0
    %531 = vmatprep.subr.mxu0 0.0
    %532 = vmatpush1.msra.mxu0 0.0
    %533 = vmatprep.subr.mxu0 0.0
    %534 = vmatpush1.msra.mxu0 0.0
    %535 = vmatprep.subr.mxu0 0.0
    %536 = vmatpush1.msra.mxu0 0.0
    %537 = vmatprep.subr.mxu0 0.0
    %538 = vmatpush1.msra.mxu0 0.0
    %539 = vmatprep.mubr.f32.mxu0 0.0
    %540 = vmatmul.mubr.f32.gmra.mrb[0].mxu0 %v338
    %v541 = vpop.f32.mrb[0].mxu0
    %v542 = vadd.f32 %v400, %v541
    %v543 = vpop.f32.mrb[0].mxu0
    %544 = vdwg.mxu0
    %v545 = vld [vmem:[%s9] sm:$0x1]
    %v546 = vld [vmem:[%s10] sm:$0x1]
    %v548 = vlaneseq
    %v549 = vshrl.u32 %v548, 7
    %v550 = vsub.s32 0, %v549
    %v551 = vrot.slane %v545, %v550
    %v553 = vsub.f32 %v551, %v473
    %v554 = vmax.f32 %v553, 0.0
    %v555 = vand.u32 2147483647, %v553
    %v556 = vsub.f32 0.0, %v555
    %v557 = vmul.f32 %v556, 1.442695
    %v558 = vpow.pop %v557
    %v559 = vadd.f32 %v558, 1.0
    %v560 = vlog2.pop %v559
    %v561 = vmul.f32 %v560, 0.6931472
    %v562 = vmul.f32 -0.5, %v558
    %v563 = vadd.f32 %v562, 1.0
    %v564 = vmul.f32 %v563, %v558
    %v565 = vand.u32 2147483647, %v558
    %vm566 = vcmp.lt.f32.partialorder %v565, 0.0004427343
    %v567 = vsel %vm566, %v564, %v561
    %v568 = vadd.f32 %v554, %v567
    %v569 = vsub.f32 %v551, %v568
    %v571 = vlaneseq
    %v572 = vshrl.u32 %v571, 7
    %v573 = vsub.s32 0, %v572
    %v574 = vrot.slane %v546, %v573
    %v576 = vsub.f32 %v569, %v574
    %v577 = vmax.f32 %v576, 0.0
    %v578 = vand.u32 2147483647, %v576
    %v579 = vsub.f32 0.0, %v578
    %v580 = vmul.f32 %v579, 1.442695
    %v581 = vpow.pop %v580
    %v582 = vadd.f32 %v581, 1.0
    %v583 = vlog2.pop %v582
    %v584 = vmul.f32 %v583, 0.6931472
    %v585 = vmul.f32 -0.5, %v581
    %v586 = vadd.f32 %v585, 1.0
    %v587 = vmul.f32 %v586, %v581
    %v588 = vand.u32 2147483647, %v581
    %vm589 = vcmp.lt.f32.partialorder %v588, 0.0004427343
    %v590 = vsel %vm589, %v587, %v584
    %v591 = vadd.f32 %v577, %v590
    %v592 = vadd.f32 %v574, %v591
    %v593 = vmul.f32 %v592, 0.5
    %v594 = vmul.f32 %v593, 1.442695
    %v595 = vpow.pop %v594
    %v596 = vld [vmem:[%s2] sm:$0xff]
    %v597 = vmul.f32 %v596, %v595
    %v598 = vadd.f32 %v471, %v597
    %v599 = vlaneseq
    %v600 = vand.u32 %v599, 127
    %vm601 = vcmp.lt.s32.totalorder %v600, 8
    %v602 = vsel %vm601, %v598, %v542
    %603 = vst [vmem:[%s11] sm:$0xff] %v602
    // Predicated region
    $region54: #{pets_model_forward.1} parent=1 // pred_check
      _
    $region55: #{pets_model_forward.1} parent=1 // pred_check_branch
      %605 = sbr.rel (0) target = $region57
    $region56: #{pets_model_forward.1} parent=1 // pred_region
      _
    $region57: #{pets_model_forward.1} parent=1 // pred_fallthru
      _
    // Predicated region
    $region58: #{pets_model_forward.1} parent=1 // pred_check
      _
    $region59: #{pets_model_forward.1} parent=1 // pred_check_branch
      %607 = sbr.rel (0) target = $region61
    $region60: #{pets_model_forward.1} parent=1 // pred_region
      _
    $region61: #{pets_model_forward.1} parent=1 // pred_fallthru
      _
    %608 = vsyncpa [#allocation5], 1
    %609 = vsyncpa [#allocation7], 1

</llo_original>
